<compile_context>
chip_gen: v7x
topology: tpu7x:2x2x1
jax: 0.10.0
libtpu: 0.0.40
codegen_flags: <defaults>
</compile_context>

<pallas_src>
import functools

import jax
import jax.numpy as jnp
from jax.experimental import pallas as pl
from jax.experimental.pallas import tpu as pltpu

LANE = 128            # lane width: pad all feature dims to a multiple of this
_TM_MAX = 256         # A row-tile (output rows per grid step)
_TK_MAX = 512         # A column-tile (contraction chunk)
_VMEM_LIMIT = 48 * 1024 * 1024   # safe on v7x (64 MiB/TC) and v5e/v6e


def _round_up(v, m):
    return ((v + m - 1) // m) * m


def _padded_nodes(n):
    # Small graphs -> one 128-row tile; big graphs -> multiple of both TM and TK.
    if n <= LANE:
        return LANE
    return _round_up(n, _TK_MAX)


# ---------------------------------------------------------------------------
# Kernel 1: per-layer linear  h = x @ W + b    (row-tiled, bf16 MXU, f32 accum)
# ---------------------------------------------------------------------------
def _lin_kernel(x_ref, w_ref, b_ref, h_ref):
    acc = jnp.dot(x_ref[...], w_ref[...], preferred_element_type=jnp.float32)
    acc = acc + b_ref[...]          # (1, C_out) f32 bias, broadcast over rows
    h_ref[...] = acc.astype(h_ref.dtype)


def linear_layer(x, w, b, *, tm):
    n_pad, c_in = x.shape
    c_out = w.shape[1]
    flops = 2 * n_pad * c_in * c_out
    bytes_accessed = (x.size * x.dtype.itemsize + w.size * w.dtype.itemsize
                      + b.size * b.dtype.itemsize + n_pad * c_out * 2)
    return pl.pallas_call(
        _lin_kernel,
        out_shape=jax.ShapeDtypeStruct((n_pad, c_out), jnp.bfloat16),
        grid=(n_pad // tm,),
        in_specs=[
            pl.BlockSpec((tm, c_in), lambda i: (i, 0)),
            pl.BlockSpec((c_in, c_out), lambda i: (0, 0)),
            pl.BlockSpec((1, c_out), lambda i: (0, 0)),
        ],
        out_specs=pl.BlockSpec((tm, c_out), lambda i: (i, 0)),
        compiler_params=pltpu.CompilerParams(
            dimension_semantics=("parallel",),
            vmem_limit_bytes=_VMEM_LIMIT),
        cost_estimate=pl.CostEstimate(
            flops=flops, transcendentals=0, bytes_accessed=bytes_accessed),
    )(x, w, b)


# ---------------------------------------------------------------------------
# Kernel 2: mean aggregation  out = A_norm @ h  (+ optional ReLU)
#   grid = (row tiles, contraction tiles), f32 accumulator in VMEM scratch
# ---------------------------------------------------------------------------
def _agg_kernel(a_ref, h_ref, o_ref, acc_ref, *, apply_relu):
    k = pl.program_id(1)

    @pl.when(k == 0)
    def _():
        acc_ref[...] = jnp.zeros_like(acc_ref)

    acc_ref[...] += jnp.dot(a_ref[...], h_ref[...],
                            preferred_element_type=jnp.float32)

    @pl.when(k == pl.num_programs(1) - 1)
    def _():
        out = acc_ref[...]
        if apply_relu:
            out = jnp.maximum(out, 0.0)
        o_ref[...] = out.astype(o_ref.dtype)


def aggregate_layer(a_norm, h, *, tm, tk, apply_relu, out_dtype):
    n_pad = a_norm.shape[0]
    c_out = h.shape[1]
    kernel = functools.partial(_agg_kernel, apply_relu=apply_relu)
    flops = 2 * n_pad * n_pad * c_out
    bytes_accessed = (a_norm.size * a_norm.dtype.itemsize
                      + h.size * h.dtype.itemsize
                      + n_pad * c_out * jnp.dtype(out_dtype).itemsize)
    return pl.pallas_call(
        kernel,
        out_shape=jax.ShapeDtypeStruct((n_pad, c_out), out_dtype),
        grid=(n_pad // tm, n_pad // tk),
        in_specs=[
            pl.BlockSpec((tm, tk), lambda i, k: (i, k)),      # A tile (bf16)
            pl.BlockSpec((tk, c_out), lambda i, k: (k, 0)),   # h tile (bf16)
        ],
        out_specs=pl.BlockSpec((tm, c_out), lambda i, k: (i, 0)),
        scratch_shapes=[pltpu.VMEM((tm, c_out), jnp.float32)],
        compiler_params=pltpu.CompilerParams(
            dimension_semantics=("parallel", "arbitrary"),
            vmem_limit_bytes=_VMEM_LIMIT),
        cost_estimate=pl.CostEstimate(
            flops=flops, transcendentals=0, bytes_accessed=bytes_accessed),
    )(a_norm, h)


# ---------------------------------------------------------------------------
# Glue
# ---------------------------------------------------------------------------
def build_mean_adjacency(edge_index, num_nodes, n_pad):
    """Dense row-normalized adjacency for mean aggregation, padded, bf16."""
    src = edge_index[0]
    dst = edge_index[1]
    counts = jnp.zeros((num_nodes, num_nodes), jnp.float32).at[dst, src].add(1.0)
    deg = counts.sum(axis=1, keepdims=True)
    a = counts / jnp.maximum(deg, 1.0)
    a = jnp.pad(a, ((0, n_pad - num_nodes), (0, n_pad - num_nodes)))
    return a.astype(jnp.bfloat16)


def sage_forward(params, x, edge_index):
    """Full SAGE.forward: hidden layers with ReLU, last layer raw.

    dropout=0.0, batch_norm=False, pairnorm=False (module defaults) -> no-ops.
    """
    n, c0 = x.shape
    n_pad = _padded_nodes(n)
    tm = min(_TM_MAX, n_pad)
    tk = min(_TK_MAX, n_pad)

    a_norm = build_mean_adjacency(edge_index, n, n_pad)

    # Pad node rows and feature lanes; MXU inputs in bf16.
    h = jnp.pad(x, ((0, n_pad - n), (0, _round_up(c0, LANE) - c0)))
    h = h.astype(jnp.bfloat16)

    num_layers = len(params)
    for i, (w, b) in enumerate(params):
        is_last = i == num_layers - 1
        c_in, c_out = w.shape
        c_in_pad = _round_up(c_in, LANE)
        c_out_pad = _round_up(c_out, LANE)
        w_pad = jnp.pad(w, ((0, c_in_pad - c_in),
                            (0, c_out_pad - c_out))).astype(jnp.bfloat16)
        b_pad = jnp.pad(b, ((0, 0), (0, c_out_pad - c_out)))   # keep bias in f32

        h_lin = linear_layer(h, w_pad, b_pad, tm=tm)            # x @ W + b (once)
        h = aggregate_layer(
            a_norm, h_lin, tm=tm, tk=tk,
            apply_relu=not is_last,
            out_dtype=jnp.float32 if is_last else jnp.bfloat16)

    out_channels = params[-1][0].shape[1]
    return h[:n, :out_channels]


def init_params(key, in_channels, hidden_channels, out_channels, num_layers):
    """Deterministic Linear init (uniform(-1/sqrt(fan_in), 1/sqrt(fan_in)))."""
    dims = [in_channels] + [hidden_channels] * (num_layers - 1) + [out_channels]
    params = []
    layer_keys = jax.random.split(key, num_layers)
    for i in range(num_layers):
        fan_in, fan_out = dims[i], dims[i + 1]
        kw, kb = jax.random.split(layer_keys[i])
        bound = 1.0 / float(fan_in) ** 0.5
        w = jax.random.uniform(kw, (fan_in, fan_out), jnp.float32, -bound, bound)
        b = jax.random.uniform(kb, (1, fan_out), jnp.float32, -bound, bound)
        params.append((w, b))
    return params


if __name__ == "__main__":
    key = jax.random.PRNGKey(0)
    k_x, k_e, k_p = jax.random.split(key, 3)

    # Small shapes consistent with the module's forward.
    N, E = 16, 48                       # nodes, edges
    in_channels, hidden_channels = 8, 32
    out_channels, num_layers = 4, 3     # out_channels == n_class

    x = jax.random.normal(k_x, (N, in_channels), jnp.float32)
    edge_index = jax.random.randint(k_e, (2, E), 0, N, dtype=jnp.int32)
    # label_p / cm are only consumed when rsl > 0.0; default rsl=0.0 -> unused.

    params = init_params(k_p, in_channels, hidden_channels, out_channels, num_layers)

    out = sage_forward(params, x, edge_index)
    jax.block_until_ready(out)
    assert out.shape == (N, out_channels)

    # Pure-JAX f32 reference of the same forward (bias before mean-aggregation,
    # ReLU on hidden layers only). bf16 MXU inputs -> loose tolerance.
    def ref_forward(params, x, edge_index):
        src, dst = edge_index[0], edge_index[1]
        counts = jnp.zeros((N, N), jnp.float32).at[dst, src].add(1.0)
        a = counts / jnp.maximum(counts.sum(axis=1, keepdims=True), 1.0)
        h = x
        for i, (w, b) in enumerate(params):
            h = a @ (h @ w + b)
            if i != len(params) - 1:
                h = jnp.maximum(h, 0.0)
        return h

    ref = ref_forward(params, x, edge_index)
    assert bool(jnp.all(jnp.isfinite(out)))
    assert bool(jnp.allclose(out, ref, atol=1e-1, rtol=1e-1)), \
        float(jnp.max(jnp.abs(out - ref)))
    print("KERNEL_OK")
</pallas_src>

<mosaic_0001>
module attributes {stable_mosaic.version = 11 : i64} {
  func.func @_lin_kernel(%arg0: i32, %arg1: memref<128x128xbf16, #tpu.memory_space<vmem>>, %arg2: memref<128x128xbf16, #tpu.memory_space<vmem>>, %arg3: memref<1x128xf32, #tpu.memory_space<vmem>>, %arg4: memref<128x128xbf16, #tpu.memory_space<vmem>>) attributes {dimension_semantics = [#tpu.dimension_semantics<parallel>], iteration_bounds = array<i64: 1>, scalar_prefetch = 0 : i64, scratch_operands = 0 : i64, tpu.core_type = #tpu.core_type<tc>, window_params = [{transform_indices = @transform_0, window_bounds = array<i64: 128, 128>}, {pipeline_mode = #tpu.pipeline_mode<synchronous>, transform_indices = @transform_1, window_bounds = array<i64: 128, 128>}, {pipeline_mode = #tpu.pipeline_mode<synchronous>, transform_indices = @transform_2, window_bounds = array<i64: 1, 128>}, {transform_indices = @transform_3, window_bounds = array<i64: 128, 128>}]} {
    %c0 = arith.constant 0 : index
    %c0_0 = arith.constant 0 : index
    %0 = vector.load %arg1[%c0, %c0_0] : memref<128x128xbf16, #tpu.memory_space<vmem>>, vector<128x128xbf16>
    %c0_1 = arith.constant 0 : index
    %c0_2 = arith.constant 0 : index
    %1 = vector.load %arg2[%c0_1, %c0_2] : memref<128x128xbf16, #tpu.memory_space<vmem>>, vector<128x128xbf16>
    %cst = arith.constant dense<0.000000e+00> : vector<128x128xf32>
    %2 = tpu.matmul %0, %1, %cst {dimension_numbers = #tpu.dot_dimension_numbers<[1], [0], [0], [1], [0, 0, 1, 1], [], []>} : vector<128x128xbf16>, vector<128x128xbf16>, vector<128x128xf32> -> vector<128x128xf32>
    %c0_3 = arith.constant 0 : index
    %c0_4 = arith.constant 0 : index
    %3 = vector.load %arg3[%c0_3, %c0_4] : memref<1x128xf32, #tpu.memory_space<vmem>>, vector<1x128xf32>
    %4 = vector.broadcast %3 : vector<1x128xf32> to vector<128x128xf32>
    %5 = arith.addf %2, %4 : vector<128x128xf32>
    %6 = arith.truncf %5 : vector<128x128xf32> to vector<128x128xbf16>
    %c0_5 = arith.constant 0 : index
    %c0_6 = arith.constant 0 : index
    %7 = vector.load %arg4[%c0_5, %c0_6] : memref<128x128xbf16, #tpu.memory_space<vmem>>, vector<128x128xbf16>
    tpu.vector_store %arg4[%c0_5, %c0_6], %6 {strides = array<i32>} : memref<128x128xbf16, #tpu.memory_space<vmem>>, vector<128x128xbf16>,
    return
  }
  func.func @transform_0(%arg0: i32) -> (i32, i32) {
    %c0_i32 = arith.constant 0 : i32
    %c0_i32_0 = arith.constant 0 : i32
    return %arg0, %c0_i32 : i32, i32
  }
  func.func @transform_1(%arg0: i32) -> (i32, i32) {
    %c0_i32 = arith.constant 0 : i32
    %c0_i32_0 = arith.constant 0 : i32
    %c0_i32_1 = arith.constant 0 : i32
    return %c0_i32, %c0_i32_0 : i32, i32
  }
  func.func @transform_2(%arg0: i32) -> (i32, i32) {
    %c0_i32 = arith.constant 0 : i32
    %c0_i32_0 = arith.constant 0 : i32
    %c0_i32_1 = arith.constant 0 : i32
    return %c0_i32, %c0_i32_0 : i32, i32
  }
  func.func @transform_3(%arg0: i32) -> (i32, i32) {
    %c0_i32 = arith.constant 0 : i32
    %c0_i32_0 = arith.constant 0 : i32
    return %arg0, %c0_i32 : i32, i32
  }
}

</mosaic_0001>

<llo_original>
// kernel: tpu_custom_call.1
$region0: #{tpu_custom_call.1}
  #allocation0 [shape = 'u32[]', space=smem, size = 0x4, offset = 0x4, fixed_abs, tag = 'smem constant byte address 0x4 - core index']
  #allocation1 [shape = 'u32[144,128]{1,0:T(1,128)}', space=vmem, size = 0x12000, scoped, tag = 'internal scratch']
  %s0 = inlined_call_operand.hbm [shape: bf16[128,128], index: 0, kind: input, shape index: {}]
  %s1 = inlined_call_operand.hbm [shape: bf16[128,128], index: 1, kind: input, shape index: {}]
  %s2 = inlined_call_operand.vmem [shape: f32[1,128], index: 2, kind: input, shape index: {}]
  %s3 = inlined_call_operand.hbm [shape: bf16[128,128], index: 3, kind: output, shape index: {}]
  %s4 = sld [smem:[#allocation0]]
  $region30: #{tpu_custom_call.1} parent=0
    _
  %s6 = ssub.s32 1, %s4
  %s7 = scalar_select 0, %s6, %s4
  $region1: #{tpu_custom_call.1} parent=0
    #allocation2 [shape = 'u8[32768]{0}', space=vmem, size = 0x8000, scoped, tag = 'input window, operand 0, single buffered']
    #allocation3 [shape = 's32[1]{0}', space=sflag, size = 0x4, scoped, tag = 'scoped memory for tpu_custom_call.1']
    #allocation4 [shape = 's32[1]{0}', space=sflag, size = 0x4, scoped, tag = 'scoped memory for tpu_custom_call.1']
    #allocation5 [shape = 'u8[32768]{0}', space=vmem, size = 0x8000, scoped, tag = 'input window, operand 1, single buffered']
    #allocation6 [shape = 's32[1]{0}', space=sflag, size = 0x4, scoped, tag = 'scoped memory for tpu_custom_call.1']
    #allocation7 [shape = 'u8[32768]{0}', space=vmem, size = 0x8000, scoped, tag = 'output window, operand 0, single buffered']
    %8 = vsyncpa [#allocation3], 0
    %9 = vsyncpa [#allocation6], 0
    %10 = vsyncpa [#allocation4], 0
    // Predicated region
    $region2: #{tpu_custom_call.1} parent=1 // pred_check
      _
    $region3: #{tpu_custom_call.1} parent=1 // pred_check_branch
      %12 = sbr.rel (0) target = $region5
    $region4: #{tpu_custom_call.1} parent=1 // pred_region
      %s14 = ssub.s32 1024, 1024
      %15 = vsyncadd [#allocation3], %s14
      %s16 = sshll.u32 [#allocation2], 4
      %s17 = int_to_ptr.vmem [resolvable:$true] %s16
      %22 = dma.hbm_to_vmem [thread:$0]  %s0, 1024, %s17, [#allocation3], 64, 64, 4
    $region5: #{tpu_custom_call.1} parent=1 // pred_fallthru
      _
    // Predicated region
    $region6: #{tpu_custom_call.1} parent=1 // pred_check
      _
    $region7: #{tpu_custom_call.1} parent=1 // pred_check_branch
      %24 = sbr.rel (0) target = $region9
    $region8: #{tpu_custom_call.1} parent=1 // pred_region
      %s26 = ssub.s32 1024, 1024
      %27 = vsyncadd [#allocation6], %s26
      %s28 = sshll.u32 [#allocation5], 4
      %s29 = int_to_ptr.vmem [resolvable:$true] %s28
      %34 = dma.hbm_to_vmem [thread:$0]  %s1, 1024, %s29, [#allocation6], 64, 64, 4
    $region9: #{tpu_custom_call.1} parent=1 // pred_fallthru
      _
    // Predicated region
    $region10: #{tpu_custom_call.1} parent=1 // pred_check
      _
    $region11: #{tpu_custom_call.1} parent=1 // pred_check_branch
      %36 = sbr.rel (0) target = $region13
    $region12: #{tpu_custom_call.1} parent=1 // pred_region
      _
    $region13: #{tpu_custom_call.1} parent=1 // pred_fallthru
      _
    // Predicated region
    $region14: #{tpu_custom_call.1} parent=1 // pred_check
      _
    $region15: #{tpu_custom_call.1} parent=1 // pred_check_branch
      %38 = sbr.rel (0) target = $region17
    $region16: #{tpu_custom_call.1} parent=1 // pred_region
      %39 = dma.done [#allocation3], 1024
    $region17: #{tpu_custom_call.1} parent=1 // pred_fallthru
      _
    // Predicated region
    $region18: #{tpu_custom_call.1} parent=1 // pred_check
      _
    $region19: #{tpu_custom_call.1} parent=1 // pred_check_branch
      %41 = sbr.rel (0) target = $region21
    $region20: #{tpu_custom_call.1} parent=1 // pred_region
      %42 = dma.done [#allocation6], 1024
    $region21: #{tpu_custom_call.1} parent=1 // pred_fallthru
      _
    %v44 = vld [vmem:[#allocation2] sm:$0xf]
    %v45 = vld [vmem:[#allocation2 + $0x4] sm:$0xf]
    %v46 = vld [vmem:[#allocation2 + $0x8] sm:$0xf]
    %v47 = vld [vmem:[#allocation2 + $0xc] sm:$0xf]
    %v48 = vld [vmem:[#allocation2 + $0x10] sm:$0xf]
    %v49 = vld [vmem:[#allocation2 + $0x14] sm:$0xf]
    %v50 = vld [vmem:[#allocation2 + $0x18] sm:$0xf]
    %v51 = vld [vmem:[#allocation2 + $0x1c] sm:$0xf]
    %v52 = vld [vmem:[#allocation2 + $0x20] sm:$0xf]
    %v53 = vld [vmem:[#allocation2 + $0x24] sm:$0xf]
    %v54 = vld [vmem:[#allocation2 + $0x28] sm:$0xf]
    %v55 = vld [vmem:[#allocation2 + $0x2c] sm:$0xf]
    %v56 = vld [vmem:[#allocation2 + $0x30] sm:$0xf]
    %v57 = vld [vmem:[#allocation2 + $0x34] sm:$0xf]
    %v58 = vld [vmem:[#allocation2 + $0x38] sm:$0xf]
    %v59 = vld [vmem:[#allocation2 + $0x3c] sm:$0xf]
    %v60 = vld [vmem:[#allocation5] sm:$0xf]
    %v61 = vld [vmem:[#allocation5 + $0x4] sm:$0xf]
    %v62 = vld [vmem:[#allocation5 + $0x8] sm:$0xf]
    %v63 = vld [vmem:[#allocation5 + $0xc] sm:$0xf]
    %v64 = vld [vmem:[#allocation5 + $0x10] sm:$0xf]
    %v65 = vld [vmem:[#allocation5 + $0x14] sm:$0xf]
    %v66 = vld [vmem:[#allocation5 + $0x18] sm:$0xf]
    %v67 = vld [vmem:[#allocation5 + $0x1c] sm:$0xf]
    %v68 = vld [vmem:[#allocation5 + $0x20] sm:$0xf]
    %v69 = vld [vmem:[#allocation5 + $0x24] sm:$0xf]
    %v70 = vld [vmem:[#allocation5 + $0x28] sm:$0xf]
    %v71 = vld [vmem:[#allocation5 + $0x2c] sm:$0xf]
    %v72 = vld [vmem:[#allocation5 + $0x30] sm:$0xf]
    %v73 = vld [vmem:[#allocation5 + $0x34] sm:$0xf]
    %v74 = vld [vmem:[#allocation5 + $0x38] sm:$0xf]
    %v75 = vld [vmem:[#allocation5 + $0x3c] sm:$0xf]
    %v76 = vld [vmem:[%s2] sm:$0x1]
    %v78 = vlaneseq
    %v79 = vshrl.u32 %v78, 7
    %v80 = vsub.s32 0, %v79
    %v81 = vrot.slane %v76, %v80
    %v99 = vunpack.c.l.b16 %v44
    %v100 = vunpack.c.l.b16 %v45
    %v101 = vunpack.c.l.b16 %v46
    %v102 = vunpack.c.l.b16 %v47
    %v103 = vunpack.c.l.b16 %v48
    %v104 = vunpack.c.l.b16 %v49
    %v105 = vunpack.c.l.b16 %v50
    %v106 = vunpack.c.l.b16 %v51
    %v107 = vunpack.c.l.b16 %v52
    %v108 = vunpack.c.l.b16 %v53
    %v109 = vunpack.c.l.b16 %v54
    %v110 = vunpack.c.l.b16 %v55
    %v111 = vunpack.c.l.b16 %v56
    %v112 = vunpack.c.l.b16 %v57
    %v113 = vunpack.c.l.b16 %v58
    %v114 = vunpack.c.l.b16 %v59
    %v115 = vpack.c.b16 %v100, %v99
    %v116 = vpack.c.b16 %v102, %v101
    %v117 = vpack.c.b16 %v104, %v103
    %v118 = vpack.c.b16 %v106, %v105
    %v119 = vpack.c.b16 %v108, %v107
    %v120 = vpack.c.b16 %v110, %v109
    %v121 = vpack.c.b16 %v112, %v111
    %v122 = vpack.c.b16 %v114, %v113
    %v147 = vunpack.c.l.b16 %v60
    %v148 = vunpack.c.l.b16 %v61
    %v149 = vunpack.c.l.b16 %v62
    %v150 = vunpack.c.l.b16 %v63
    %v151 = vunpack.c.l.b16 %v64
    %v152 = vunpack.c.l.b16 %v65
    %v153 = vunpack.c.l.b16 %v66
    %v154 = vunpack.c.l.b16 %v67
    %v155 = vunpack.c.l.b16 %v68
    %v156 = vunpack.c.l.b16 %v69
    %v157 = vunpack.c.l.b16 %v70
    %v158 = vunpack.c.l.b16 %v71
    %v159 = vunpack.c.l.b16 %v72
    %v160 = vunpack.c.l.b16 %v73
    %v161 = vunpack.c.l.b16 %v74
    %v162 = vunpack.c.l.b16 %v75
    %v163 = vpack.c.b16 %v148, %v147
    %v164 = vpack.c.b16 %v150, %v149
    %v165 = vpack.c.b16 %v152, %v151
    %v166 = vpack.c.b16 %v154, %v153
    %v167 = vpack.c.b16 %v156, %v155
    %v168 = vpack.c.b16 %v158, %v157
    %v169 = vpack.c.b16 %v160, %v159
    %v170 = vpack.c.b16 %v162, %v161
    %179 = vmatprep.subr.bf16.mxu0 0
    %180 = vmatpush1.bf16.msra.mxu0 %v163
    %181 = vmatprep.subr.bf16.mxu0 0
    %182 = vmatpush1.bf16.msra.mxu0 %v164
    %183 = vmatprep.subr.bf16.mxu0 0
    %184 = vmatpush1.bf16.msra.mxu0 %v165
    %185 = vmatprep.subr.bf16.mxu0 0
    %186 = vmatpush1.bf16.msra.mxu0 %v166
    %187 = vmatprep.subr.bf16.mxu0 0
    %188 = vmatpush1.bf16.msra.mxu0 %v167
    %189 = vmatprep.subr.bf16.mxu0 0
    %190 = vmatpush1.bf16.msra.mxu0 %v168
    %191 = vmatprep.subr.bf16.mxu0 0
    %192 = vmatpush1.bf16.msra.mxu0 %v169
    %193 = vmatprep.subr.bf16.mxu0 0
    %194 = vmatpush1.bf16.msra.mxu0 %v170
    %195 = vmatprep.subr.bf16.mxu0 0
    %196 = vmatpush1.bf16.msra.mxu0 0
    %197 = vmatprep.subr.bf16.mxu0 0
    %198 = vmatpush1.bf16.msra.mxu0 0
    %199 = vmatprep.subr.bf16.mxu0 0
    %200 = vmatpush1.bf16.msra.mxu0 0
    %201 = vmatprep.subr.bf16.mxu0 0
    %202 = vmatpush1.bf16.msra.mxu0 0
    %203 = vmatprep.subr.bf16.mxu0 0
    %204 = vmatpush1.bf16.msra.mxu0 0
    %205 = vmatprep.subr.bf16.mxu0 0
    %206 = vmatpush1.bf16.msra.mxu0 0
    %207 = vmatprep.subr.bf16.mxu0 0
    %208 = vmatpush1.bf16.msra.mxu0 0
    %209 = vmatprep.subr.bf16.mxu0 0
    %210 = vmatpush1.bf16.msra.mxu0 0
    %211 = vmatprep.mubr.bf16.mxu0 0
    %212 = vmatmul.mubr.bf16.gmra.mrb[0].mxu0 %v115
    %v213 = vpop.f32.mrb[0].mxu0
    %v214 = vadd.f32 %v81, %v213
    %v215 = vpop.f32.mrb[0].mxu0
    %v216 = vpop.f32.mrb[0].mxu0
    %v217 = vadd.f32 %v81, %v216
    %v218 = vpop.f32.mrb[0].mxu0
    %219 = vmatprep.mubr.bf16.mxu0 0
    %220 = vmatmul.mubr.bf16.gmra.mrb[0].mxu0 %v116
    %v221 = vpop.f32.mrb[0].mxu0
    %v222 = vadd.f32 %v81, %v221
    %v223 = vpop.f32.mrb[0].mxu0
    %v224 = vpop.f32.mrb[0].mxu0
    %v225 = vadd.f32 %v81, %v224
    %v226 = vpop.f32.mrb[0].mxu0
    %227 = vmatprep.mubr.bf16.mxu0 0
    %228 = vmatmul.mubr.bf16.gmra.mrb[0].mxu0 %v117
    %v229 = vpop.f32.mrb[0].mxu0
    %v230 = vadd.f32 %v81, %v229
    %v231 = vpop.f32.mrb[0].mxu0
    %v232 = vpop.f32.mrb[0].mxu0
    %v233 = vadd.f32 %v81, %v232
    %v234 = vpop.f32.mrb[0].mxu0
    %235 = vmatprep.mubr.bf16.mxu0 0
    %236 = vmatmul.mubr.bf16.gmra.mrb[0].mxu0 %v118
    %v237 = vpop.f32.mrb[0].mxu0
    %v238 = vadd.f32 %v81, %v237
    %v239 = vpop.f32.mrb[0].mxu0
    %v240 = vpop.f32.mrb[0].mxu0
    %v241 = vadd.f32 %v81, %v240
    %v242 = vpop.f32.mrb[0].mxu0
    %243 = vmatprep.mubr.bf16.mxu0 0
    %244 = vmatmul.mubr.bf16.gmra.mrb[0].mxu0 %v119
    %v245 = vpop.f32.mrb[0].mxu0
    %v246 = vadd.f32 %v81, %v245
    %v247 = vpop.f32.mrb[0].mxu0
    %v248 = vpop.f32.mrb[0].mxu0
    %v249 = vadd.f32 %v81, %v248
    %v250 = vpop.f32.mrb[0].mxu0
    %251 = vmatprep.mubr.bf16.mxu0 0
    %252 = vmatmul.mubr.bf16.gmra.mrb[0].mxu0 %v120
    %v253 = vpop.f32.mrb[0].mxu0
    %v254 = vadd.f32 %v81, %v253
    %v255 = vpop.f32.mrb[0].mxu0
    %v256 = vpop.f32.mrb[0].mxu0
    %v257 = vadd.f32 %v81, %v256
    %v258 = vpop.f32.mrb[0].mxu0
    %259 = vmatprep.mubr.bf16.mxu0 0
    %260 = vmatmul.mubr.bf16.gmra.mrb[0].mxu0 %v121
    %v261 = vpop.f32.mrb[0].mxu0
    %v262 = vadd.f32 %v81, %v261
    %v263 = vpop.f32.mrb[0].mxu0
    %v264 = vpop.f32.mrb[0].mxu0
    %v265 = vadd.f32 %v81, %v264
    %v266 = vpop.f32.mrb[0].mxu0
    %267 = vmatprep.mubr.bf16.mxu0 0
    %268 = vmatmul.mubr.bf16.gmra.mrb[0].mxu0 %v122
    %v269 = vpop.f32.mrb[0].mxu0
    %v270 = vadd.f32 %v81, %v269
    %v271 = vpop.f32.mrb[0].mxu0
    %v272 = vpop.f32.mrb[0].mxu0
    %v273 = vadd.f32 %v81, %v272
    %v274 = vpop.f32.mrb[0].mxu0
    %275 = vdwg.mxu0
    %v276 = vpack.c.bf16 %v217, %v214
    %v277 = vpack.c.bf16 %v225, %v222
    %v278 = vpack.c.bf16 %v233, %v230
    %v279 = vpack.c.bf16 %v241, %v238
    %v280 = vpack.c.bf16 %v249, %v246
    %v281 = vpack.c.bf16 %v257, %v254
    %v282 = vpack.c.bf16 %v265, %v262
    %v283 = vpack.c.bf16 %v273, %v270
    %v292 = vunpack.c.l.b16 %v276
    %v293 = vunpack.c.h.b16 %v276
    %v294 = vunpack.c.l.b16 %v277
    %v295 = vunpack.c.h.b16 %v277
    %v296 = vunpack.c.l.b16 %v278
    %v297 = vunpack.c.h.b16 %v278
    %v298 = vunpack.c.l.b16 %v279
    %v299 = vunpack.c.h.b16 %v279
    %v300 = vunpack.c.l.b16 %v280
    %v301 = vunpack.c.h.b16 %v280
    %v302 = vunpack.c.l.b16 %v281
    %v303 = vunpack.c.h.b16 %v281
    %v304 = vunpack.c.l.b16 %v282
    %v305 = vunpack.c.h.b16 %v282
    %v306 = vunpack.c.l.b16 %v283
    %v307 = vunpack.c.h.b16 %v283
    %v308 = vpack.c.b16 %v292, %v292
    %v309 = vpack.c.b16 %v293, %v293
    %v310 = vpack.c.b16 %v294, %v294
    %v311 = vpack.c.b16 %v295, %v295
    %v312 = vpack.c.b16 %v296, %v296
    %v313 = vpack.c.b16 %v297, %v297
    %v314 = vpack.c.b16 %v298, %v298
    %v315 = vpack.c.b16 %v299, %v299
    %v316 = vpack.c.b16 %v300, %v300
    %v317 = vpack.c.b16 %v301, %v301
    %v318 = vpack.c.b16 %v302, %v302
    %v319 = vpack.c.b16 %v303, %v303
    %v320 = vpack.c.b16 %v304, %v304
    %v321 = vpack.c.b16 %v305, %v305
    %v322 = vpack.c.b16 %v306, %v306
    %v323 = vpack.c.b16 %v307, %v307
    %340 = vst [vmem:[#allocation7] sm:$0xf] %v308
    %341 = vst [vmem:[#allocation7 + $0x4] sm:$0xf] %v309
    %342 = vst [vmem:[#allocation7 + $0x8] sm:$0xf] %v310
    %343 = vst [vmem:[#allocation7 + $0xc] sm:$0xf] %v311
    %344 = vst [vmem:[#allocation7 + $0x10] sm:$0xf] %v312
    %345 = vst [vmem:[#allocation7 + $0x14] sm:$0xf] %v313
    %346 = vst [vmem:[#allocation7 + $0x18] sm:$0xf] %v314
    %347 = vst [vmem:[#allocation7 + $0x1c] sm:$0xf] %v315
    %348 = vst [vmem:[#allocation7 + $0x20] sm:$0xf] %v316
    %349 = vst [vmem:[#allocation7 + $0x24] sm:$0xf] %v317
    %350 = vst [vmem:[#allocation7 + $0x28] sm:$0xf] %v318
    %351 = vst [vmem:[#allocation7 + $0x2c] sm:$0xf] %v319
    %352 = vst [vmem:[#allocation7 + $0x30] sm:$0xf] %v320
    %353 = vst [vmem:[#allocation7 + $0x34] sm:$0xf] %v321
    %354 = vst [vmem:[#allocation7 + $0x38] sm:$0xf] %v322
    %355 = vst [vmem:[#allocation7 + $0x3c] sm:$0xf] %v323
    // Predicated region
    $region22: #{tpu_custom_call.1} parent=1 // pred_check
      _
    $region23: #{tpu_custom_call.1} parent=1 // pred_check_branch
      %357 = sbr.rel (0) target = $region25
    $region24: #{tpu_custom_call.1} parent=1 // pred_region
      %s359 = ssub.s32 1024, 1024
      %360 = vsyncadd [#allocation4], %s359
      %s361 = sshll.u32 [#allocation7], 4
      %s362 = int_to_ptr.vmem [resolvable:$true] %s361
      %367 = dma.vmem_to_hbm [thread:$0]  %s362, 1024, %s3, [#allocation4], 64, 64, 4
    $region25: #{tpu_custom_call.1} parent=1 // pred_fallthru
      _
    // Predicated region
    $region26: #{tpu_custom_call.1} parent=1 // pred_check
      _
    $region27: #{tpu_custom_call.1} parent=1 // pred_check_branch
      %369 = sbr.rel (0) target = $region29
    $region28: #{tpu_custom_call.1} parent=1 // pred_region
      %370 = dma.done [#allocation4], 1024
    $region29: #{tpu_custom_call.1} parent=1 // pred_fallthru
      _
    %371 = vsyncpa [#allocation3], 1
    %372 = vsyncpa [#allocation6], 1
    %373 = vsyncpa [#allocation4], 1

</llo_original>
